<compile_context>
chip_gen: v6e
topology: v6e:2x2x1
jax: 0.10.0
libtpu: 0.0.40
codegen_flags: <defaults>
</compile_context>

<pallas_src>
import jax
import jax.numpy as jnp
from jax.experimental import pallas as pl
from jax.experimental.pallas import tpu as pltpu

_VMEM = pl.BlockSpec(memory_space=pltpu.MemorySpace.VMEM)


# --------------------------------------------------------------------------- #
# Pallas kernels
# --------------------------------------------------------------------------- #
def _make_conv_bn_kernel(has_residual: bool, relu: bool):
    """Fused conv (single K=9*Cin matmul) + BN(scale,bias) [+ residual] [+ ReLU]."""

    def kernel(*refs):
        if has_residual:
            taps_ref, w_ref, scale_ref, bias_ref, res_ref, out_ref = refs
        else:
            taps_ref, w_ref, scale_ref, bias_ref, out_ref = refs

        # One MXU matmul: (tm, 9*Cin) @ (9*Cin, Cout) -> f32 accumulator.
        acc = jnp.dot(taps_ref[...], w_ref[...], preferred_element_type=jnp.float32)
        y = acc * scale_ref[...] + bias_ref[...]
        if has_residual:
            y = y + res_ref[...].astype(jnp.float32)
        if relu:
            y = jnp.maximum(y, 0.0)
        out_ref[...] = y.astype(out_ref.dtype)

    return kernel


def _head_kernel(x_ref, w_ref, b_ref, out_ref):
    """Global average pool over the spatial axis + Linear (tiny; single block)."""
    x = x_ref[...].astype(jnp.float32)      # (N, H*W, C)
    pooled = jnp.mean(x, axis=1)            # (N, C) == F.avg_pool2d(out, H) + flatten
    y = jnp.dot(pooled, w_ref[...], preferred_element_type=jnp.float32) + b_ref[...]
    out_ref[...] = y.astype(out_ref.dtype)


# --------------------------------------------------------------------------- #
# Conv wrapper (im2col slicing is XLA glue; matmul + epilogue in the kernel)
# --------------------------------------------------------------------------- #
def conv3x3_bn(x, w, scale, bias, stride, residual=None, relu=True, tm=1024):
    """x: (N,H,W,Cin) NHWC.  w: (9*Cin_p, Cout) with Cin_p = Cin rounded up to 8."""
    N, H, W, Cin = x.shape
    K2, Cout = w.shape
    Cin_p = K2 // 9
    Ho = (H + 2 - 3) // stride + 1
    Wo = (W + 2 - 3) // stride + 1
    M = N * Ho * Wo

    xb = x.astype(jnp.bfloat16)
    if Cin_p != Cin:
        xb = jnp.pad(xb, ((0, 0), (0, 0), (0, 0), (0, Cin_p - Cin)))
    xp = jnp.pad(xb, ((0, 0), (1, 1), (1, 1), (0, 0)))

    # Single contiguous im2col slab (M, 9*Cin_p); K axis ordering matches the
    # row ordering of w (tap-major, then channel).
    taps = []
    for dy in range(3):
        for dx in range(3):
            sl = xp[:, dy:dy + (Ho - 1) * stride + 1:stride,
                       dx:dx + (Wo - 1) * stride + 1:stride, :]
            taps.append(sl.reshape(M, Cin_p))
    taps = jnp.concatenate(taps, axis=1)            # (M, 9*Cin_p) bf16

    # Tile the M axis; keep last dims at full extent (K2 / Cout) for the MXU.
    tm_eff = min(tm, M)
    if tm_eff != M:
        tm_eff = max(8, (tm_eff // 8) * 8)
    grid = (pl.cdiv(M, tm_eff),)

    in_specs = [
        pl.BlockSpec((tm_eff, K2), lambda i: (i, 0)),     # im2col tile
        pl.BlockSpec((K2, Cout), lambda i: (0, 0)),       # full weight, resident
        pl.BlockSpec((1, Cout), lambda i: (0, 0)),        # BN scale
        pl.BlockSpec((1, Cout), lambda i: (0, 0)),        # BN bias
    ]
    args = [taps, w.astype(jnp.bfloat16),
            scale.reshape(1, Cout), bias.reshape(1, Cout)]
    if residual is not None:
        in_specs.append(pl.BlockSpec((tm_eff, Cout), lambda i: (i, 0)))
        args.append(residual.reshape(M, Cout).astype(jnp.bfloat16))

    out = pl.pallas_call(
        _make_conv_bn_kernel(residual is not None, relu),
        out_shape=jax.ShapeDtypeStruct((M, Cout), jnp.bfloat16),
        grid=grid,
        in_specs=in_specs,
        out_specs=pl.BlockSpec((tm_eff, Cout), lambda i: (i, 0)),
        compiler_params=pltpu.CompilerParams(dimension_semantics=("parallel",)),
    )(*args)
    return out.reshape(N, Ho, Wo, Cout)


def basic_block(x, blk):
    """resnet_cifar BasicBlock: conv-bn-relu, conv-bn, option-A shortcut, add, relu."""
    s, in_planes, planes = blk["stride"], blk["in_planes"], blk["planes"]
    out = conv3x3_bn(x, blk["w1"], *blk["bn1"], stride=s, relu=True)

    if s != 1 or in_planes != planes:
        # option-A shortcut: spatial subsample + zero-pad channels
        sc = x[:, ::s, ::s, :]
        pad = (planes - in_planes) // 2
        sc = jnp.pad(sc, ((0, 0), (0, 0), (0, 0), (pad, pad)))
    else:
        sc = x

    out = conv3x3_bn(out, blk["w2"], *blk["bn2"], stride=1, residual=sc, relu=True)
    return out


# --------------------------------------------------------------------------- #
# Parameter init (deterministic, kaiming-normal like _weights_init)
# --------------------------------------------------------------------------- #
def _kaiming_conv(key, cin, cout):
    """Returns (9*cin_p, cout) with cin zero-padded up to a multiple of 8."""
    cin_p = max(8, -(-cin // 8) * 8)
    std = (2.0 / (cin * 9)) ** 0.5                      # fan_in = cin*3*3 (real cin)
    w = jax.random.normal(key, (9, cin, cout), jnp.float32) * std
    if cin_p != cin:
        w = jnp.pad(w, ((0, 0), (0, cin_p - cin), (0, 0)))
    return w.reshape(9 * cin_p, cout)


def _bn_params(c, eps=1e-5):
    gamma = jnp.ones((c,), jnp.float32)
    beta = jnp.zeros((c,), jnp.float32)
    mean = jnp.zeros((c,), jnp.float32)
    var = jnp.ones((c,), jnp.float32)
    scale = gamma / jnp.sqrt(var + eps)                 # eval-mode BN folded
    bias = beta - mean * scale
    return scale, bias


def init_resnet_params(key, num_blocks=(1, 1, 1), num_classes=10, in_channel=3):
    keys = iter(jax.random.split(key, 64))
    params = {
        "conv1": _kaiming_conv(next(keys), in_channel, 16),
        "bn1": _bn_params(16),
    }
    in_planes = 16
    layers = []
    for planes, nb, stride in zip((16, 32, 64), num_blocks, (1, 2, 2)):
        blocks = []
        for s in [stride] + [1] * (nb - 1):
            blocks.append({
                "w1": _kaiming_conv(next(keys), in_planes, planes),
                "bn1": _bn_params(planes),
                "w2": _kaiming_conv(next(keys), planes, planes),
                "bn2": _bn_params(planes),
                "stride": s,
                "in_planes": in_planes,
                "planes": planes,
            })
            in_planes = planes
        layers.append(blocks)
    params["layers"] = layers
    std = (2.0 / 64.0) ** 0.5                           # kaiming for Linear(64, nc)
    # stored pre-transposed as (in=64, out=num_classes): no per-call transpose
    params["lin_w"] = jax.random.normal(next(keys), (64, num_classes), jnp.float32) * std
    params["lin_b"] = jnp.zeros((1, num_classes), jnp.float32)
    return params


# --------------------------------------------------------------------------- #
# Forward pass
# --------------------------------------------------------------------------- #
def resnet_forward(params, x_nhwc):
    out = conv3x3_bn(x_nhwc, params["conv1"], *params["bn1"], stride=1, relu=True)
    for blocks in params["layers"]:
        for blk in blocks:
            out = basic_block(out, blk)

    N, Hf, Wf, C = out.shape
    feats = out.reshape(N, Hf * Wf, C)
    # TODO(synk): F.dropout(out) in the reference defaults to training=True
    # (stochastic); implemented as identity (eval semantics) for determinism.
    num_classes = params["lin_w"].shape[1]
    logits = pl.pallas_call(
        _head_kernel,
        out_shape=jax.ShapeDtypeStruct((N, num_classes), jnp.float32),
        in_specs=[_VMEM] * 3,
        out_specs=_VMEM,
    )(feats, params["lin_w"], params["lin_b"])
    return logits


if __name__ == "__main__":
    key = jax.random.PRNGKey(0)
    pkey, xkey = jax.random.split(key)

    params = init_resnet_params(pkey, num_blocks=(1, 1, 1), num_classes=10, in_channel=3)

    # PyTorch-style NCHW input, small shapes: batch=2, C=3, 16x16
    x_nchw = jax.random.normal(xkey, (2, 3, 16, 16), jnp.float32)
    x_nhwc = jnp.transpose(x_nchw, (0, 2, 3, 1))

    logits = resnet_forward(params, x_nhwc)
    jax.block_until_ready(logits)

    assert logits.shape == (2, 10), logits.shape
    assert bool(jnp.all(jnp.isfinite(logits)))
    print("KERNEL_OK")
</pallas_src>

<mosaic_0001>
module attributes {stable_mosaic.version = 11 : i64} {
  func.func @kernel(%arg0: i32, %arg1: memref<512x72xbf16, #tpu.memory_space<vmem>>, %arg2: memref<72x16xbf16, #tpu.memory_space<vmem>>, %arg3: memref<1x16xf32, #tpu.memory_space<vmem>>, %arg4: memref<1x16xf32, #tpu.memory_space<vmem>>, %arg5: memref<512x16xbf16, #tpu.memory_space<vmem>>) attributes {dimension_semantics = [#tpu.dimension_semantics<parallel>], iteration_bounds = array<i64: 1>, scalar_prefetch = 0 : i64, scratch_operands = 0 : i64, tpu.core_type = #tpu.core_type<tc>, window_params = [{transform_indices = @transform_0, window_bounds = array<i64: 512, 72>}, {pipeline_mode = #tpu.pipeline_mode<synchronous>, transform_indices = @transform_1, window_bounds = array<i64: 72, 16>}, {pipeline_mode = #tpu.pipeline_mode<synchronous>, transform_indices = @transform_2, window_bounds = array<i64: 1, 16>}, {pipeline_mode = #tpu.pipeline_mode<synchronous>, transform_indices = @transform_3, window_bounds = array<i64: 1, 16>}, {transform_indices = @transform_4, window_bounds = array<i64: 512, 16>}]} {
    %c0 = arith.constant 0 : index
    %c0_0 = arith.constant 0 : index
    %0 = vector.load %arg1[%c0, %c0_0] : memref<512x72xbf16, #tpu.memory_space<vmem>>, vector<512x72xbf16>
    %c0_1 = arith.constant 0 : index
    %c0_2 = arith.constant 0 : index
    %1 = vector.load %arg2[%c0_1, %c0_2] : memref<72x16xbf16, #tpu.memory_space<vmem>>, vector<72x16xbf16>
    %cst = arith.constant dense<0.000000e+00> : vector<512x16xf32>
    %2 = tpu.matmul %0, %1, %cst {dimension_numbers = #tpu.dot_dimension_numbers<[1], [0], [0], [1], [0, 0, 1, 1], [], []>} : vector<512x72xbf16>, vector<72x16xbf16>, vector<512x16xf32> -> vector<512x16xf32>
    %c0_3 = arith.constant 0 : index
    %c0_4 = arith.constant 0 : index
    %3 = vector.load %arg3[%c0_3, %c0_4] : memref<1x16xf32, #tpu.memory_space<vmem>>, vector<1x16xf32>
    %4 = vector.broadcast %3 : vector<1x16xf32> to vector<512x16xf32>
    %5 = arith.mulf %2, %4 : vector<512x16xf32>
    %c0_5 = arith.constant 0 : index
    %c0_6 = arith.constant 0 : index
    %6 = vector.load %arg4[%c0_5, %c0_6] : memref<1x16xf32, #tpu.memory_space<vmem>>, vector<1x16xf32>
    %7 = vector.broadcast %6 : vector<1x16xf32> to vector<512x16xf32>
    %8 = arith.addf %5, %7 : vector<512x16xf32>
    %cst_7 = arith.constant 0.000000e+00 : f32
    %9 = vector.broadcast %cst_7 : f32 to vector<512x16xf32>
    %10 = arith.maximumf %8, %9 : vector<512x16xf32>
    %11 = arith.truncf %10 : vector<512x16xf32> to vector<512x16xbf16>
    %c0_8 = arith.constant 0 : index
    %c0_9 = arith.constant 0 : index
    %12 = vector.load %arg5[%c0_8, %c0_9] : memref<512x16xbf16, #tpu.memory_space<vmem>>, vector<512x16xbf16>
    tpu.vector_store %arg5[%c0_8, %c0_9], %11 {strides = array<i32>} : memref<512x16xbf16, #tpu.memory_space<vmem>>, vector<512x16xbf16>,
    return
  }
  func.func @transform_0(%arg0: i32) -> (i32, i32) {
    %c0_i32 = arith.constant 0 : i32
    %c0_i32_0 = arith.constant 0 : i32
    return %arg0, %c0_i32 : i32, i32
  }
  func.func @transform_1(%arg0: i32) -> (i32, i32) {
    %c0_i32 = arith.constant 0 : i32
    %c0_i32_0 = arith.constant 0 : i32
    %c0_i32_1 = arith.constant 0 : i32
    return %c0_i32, %c0_i32_0 : i32, i32
  }
  func.func @transform_2(%arg0: i32) -> (i32, i32) {
    %c0_i32 = arith.constant 0 : i32
    %c0_i32_0 = arith.constant 0 : i32
    %c0_i32_1 = arith.constant 0 : i32
    return %c0_i32, %c0_i32_0 : i32, i32
  }
  func.func @transform_3(%arg0: i32) -> (i32, i32) {
    %c0_i32 = arith.constant 0 : i32
    %c0_i32_0 = arith.constant 0 : i32
    %c0_i32_1 = arith.constant 0 : i32
    return %c0_i32, %c0_i32_0 : i32, i32
  }
  func.func @transform_4(%arg0: i32) -> (i32, i32) {
    %c0_i32 = arith.constant 0 : i32
    %c0_i32_0 = arith.constant 0 : i32
    return %arg0, %c0_i32 : i32, i32
  }
}

</mosaic_0001>

<llo_original>
// kernel: tpu_custom_call.1
$region0: #{tpu_custom_call.1}
  #allocation0 [shape = 'u32[]', space=smem, size = 0x4, offset = 0x4, fixed_abs, tag = 'smem constant byte address 0x4 - core index']
  #allocation1 [shape = 'u32[144,128]{1,0:T(1,128)}', space=vmem, size = 0x12000, scoped, tag = 'internal scratch']
  %s0 = inlined_call_operand.vmem [shape: bf16[512,72], index: 0, kind: input, shape index: {}]
  %s1 = inlined_call_operand.vmem [shape: bf16[72,16], index: 1, kind: input, shape index: {}]
  %s2 = inlined_call_operand.vmem [shape: f32[1,16], index: 2, kind: input, shape index: {}]
  %s3 = inlined_call_operand.vmem [shape: f32[1,16], index: 3, kind: input, shape index: {}]
  %s4 = inlined_call_operand.vmem [shape: bf16[512,16], index: 4, kind: output, shape index: {}]
  %s5 = sld [smem:[#allocation0]]
  $region26: #{tpu_custom_call.1} parent=0
    _
  %s7 = ssub.s32 1, %s5
  %s8 = scalar_select 0, %s7, %s5
  // Predicated region
  $region2: #{tpu_custom_call.1} parent=0 // pred_check
    _
  $region3: #{tpu_custom_call.1} parent=0 // pred_check_branch
    %10 = sbr.rel (0) target = $region5
  $region4: #{tpu_custom_call.1} parent=0 // pred_region
    _
  $region5: #{tpu_custom_call.1} parent=0 // pred_fallthru
    _
  // Predicated region
  $region6: #{tpu_custom_call.1} parent=0 // pred_check
    _
  $region7: #{tpu_custom_call.1} parent=0 // pred_check_branch
    %12 = sbr.rel (0) target = $region9
  $region8: #{tpu_custom_call.1} parent=0 // pred_region
    _
  $region9: #{tpu_custom_call.1} parent=0 // pred_fallthru
    _
  // Predicated region
  $region10: #{tpu_custom_call.1} parent=0 // pred_check
    _
  $region11: #{tpu_custom_call.1} parent=0 // pred_check_branch
    %14 = sbr.rel (0) target = $region13
  $region12: #{tpu_custom_call.1} parent=0 // pred_region
    _
  $region13: #{tpu_custom_call.1} parent=0 // pred_fallthru
    _
  // Predicated region
  $region14: #{tpu_custom_call.1} parent=0 // pred_check
    _
  $region15: #{tpu_custom_call.1} parent=0 // pred_check_branch
    %16 = sbr.rel (0) target = $region17
  $region16: #{tpu_custom_call.1} parent=0 // pred_region
    _
  $region17: #{tpu_custom_call.1} parent=0 // pred_fallthru
    _
  %v18 = vld [vmem:[%s0] sm:$0xf]
  %v19 = vld [vmem:[%s0 + $0x4] sm:$0xf]
  %v20 = vld [vmem:[%s0 + $0x8] sm:$0xf]
  %v21 = vld [vmem:[%s0 + $0xc] sm:$0xf]
  %v22 = vld [vmem:[%s0 + $0x10] sm:$0xf]
  %v23 = vld [vmem:[%s0 + $0x14] sm:$0xf]
  %v24 = vld [vmem:[%s0 + $0x18] sm:$0xf]
  %v25 = vld [vmem:[%s0 + $0x1c] sm:$0xf]
  %v26 = vld [vmem:[%s0 + $0x20] sm:$0xf]
  %v27 = vld [vmem:[%s0 + $0x24] sm:$0xf]
  %v28 = vld [vmem:[%s0 + $0x28] sm:$0xf]
  %v29 = vld [vmem:[%s0 + $0x2c] sm:$0xf]
  %v30 = vld [vmem:[%s0 + $0x30] sm:$0xf]
  %v31 = vld [vmem:[%s0 + $0x34] sm:$0xf]
  %v32 = vld [vmem:[%s0 + $0x38] sm:$0xf]
  %v33 = vld [vmem:[%s0 + $0x3c] sm:$0xf]
  %v34 = vld [vmem:[%s0 + $0x40] sm:$0xf]
  %v35 = vld [vmem:[%s0 + $0x44] sm:$0xf]
  %v36 = vld [vmem:[%s0 + $0x48] sm:$0xf]
  %v37 = vld [vmem:[%s0 + $0x4c] sm:$0xf]
  %v38 = vld [vmem:[%s0 + $0x50] sm:$0xf]
  %v39 = vld [vmem:[%s0 + $0x54] sm:$0xf]
  %v40 = vld [vmem:[%s0 + $0x58] sm:$0xf]
  %v41 = vld [vmem:[%s0 + $0x5c] sm:$0xf]
  %v42 = vld [vmem:[%s0 + $0x60] sm:$0xf]
  %v43 = vld [vmem:[%s0 + $0x64] sm:$0xf]
  %v44 = vld [vmem:[%s0 + $0x68] sm:$0xf]
  %v45 = vld [vmem:[%s0 + $0x6c] sm:$0xf]
  %v46 = vld [vmem:[%s0 + $0x70] sm:$0xf]
  %v47 = vld [vmem:[%s0 + $0x74] sm:$0xf]
  %v48 = vld [vmem:[%s0 + $0x78] sm:$0xf]
  %v49 = vld [vmem:[%s0 + $0x7c] sm:$0xf]
  %v50 = vld [vmem:[%s0 + $0x80] sm:$0xf]
  %v51 = vld [vmem:[%s0 + $0x84] sm:$0xf]
  %v52 = vld [vmem:[%s0 + $0x88] sm:$0xf]
  %v53 = vld [vmem:[%s0 + $0x8c] sm:$0xf]
  %v54 = vld [vmem:[%s0 + $0x90] sm:$0xf]
  %v55 = vld [vmem:[%s0 + $0x94] sm:$0xf]
  %v56 = vld [vmem:[%s0 + $0x98] sm:$0xf]
  %v57 = vld [vmem:[%s0 + $0x9c] sm:$0xf]
  %v58 = vld [vmem:[%s0 + $0xa0] sm:$0xf]
  %v59 = vld [vmem:[%s0 + $0xa4] sm:$0xf]
  %v60 = vld [vmem:[%s0 + $0xa8] sm:$0xf]
  %v61 = vld [vmem:[%s0 + $0xac] sm:$0xf]
  %v62 = vld [vmem:[%s0 + $0xb0] sm:$0xf]
  %v63 = vld [vmem:[%s0 + $0xb4] sm:$0xf]
  %v64 = vld [vmem:[%s0 + $0xb8] sm:$0xf]
  %v65 = vld [vmem:[%s0 + $0xbc] sm:$0xf]
  %v66 = vld [vmem:[%s0 + $0xc0] sm:$0xf]
  %v67 = vld [vmem:[%s0 + $0xc4] sm:$0xf]
  %v68 = vld [vmem:[%s0 + $0xc8] sm:$0xf]
  %v69 = vld [vmem:[%s0 + $0xcc] sm:$0xf]
  %v70 = vld [vmem:[%s0 + $0xd0] sm:$0xf]
  %v71 = vld [vmem:[%s0 + $0xd4] sm:$0xf]
  %v72 = vld [vmem:[%s0 + $0xd8] sm:$0xf]
  %v73 = vld [vmem:[%s0 + $0xdc] sm:$0xf]
  %v74 = vld [vmem:[%s0 + $0xe0] sm:$0xf]
  %v75 = vld [vmem:[%s0 + $0xe4] sm:$0xf]
  %v76 = vld [vmem:[%s0 + $0xe8] sm:$0xf]
  %v77 = vld [vmem:[%s0 + $0xec] sm:$0xf]
  %v78 = vld [vmem:[%s0 + $0xf0] sm:$0xf]
  %v79 = vld [vmem:[%s0 + $0xf4] sm:$0xf]
  %v80 = vld [vmem:[%s0 + $0xf8] sm:$0xf]
  %v81 = vld [vmem:[%s0 + $0xfc] sm:$0xf]
  %v82 = vld [vmem:[%s1] sm:$0xf]
  %v83 = vld [vmem:[%s1 + $0x4] sm:$0xf]
  %v84 = vld [vmem:[%s1 + $0x8] sm:$0xf]
  %v85 = vld [vmem:[%s1 + $0xc] sm:$0xf]
  %v86 = vld [vmem:[%s1 + $0x10] sm:$0xf]
  %v87 = vld [vmem:[%s1 + $0x14] sm:$0xf]
  %v88 = vld [vmem:[%s1 + $0x18] sm:$0xf]
  %v89 = vld [vmem:[%s1 + $0x1c] sm:$0xf]
  %v90 = vld [vmem:[%s1 + $0x20] sm:$0xf]
  %v155 = vunpack.c.l.b16 %v18
  %v156 = vunpack.c.l.b16 %v19
  %v157 = vunpack.c.l.b16 %v20
  %v158 = vunpack.c.l.b16 %v21
  %v159 = vunpack.c.l.b16 %v22
  %v160 = vunpack.c.l.b16 %v23
  %v161 = vunpack.c.l.b16 %v24
  %v162 = vunpack.c.l.b16 %v25
  %v163 = vunpack.c.l.b16 %v26
  %v164 = vunpack.c.l.b16 %v27
  %v165 = vunpack.c.l.b16 %v28
  %v166 = vunpack.c.l.b16 %v29
  %v167 = vunpack.c.l.b16 %v30
  %v168 = vunpack.c.l.b16 %v31
  %v169 = vunpack.c.l.b16 %v32
  %v170 = vunpack.c.l.b16 %v33
  %v171 = vunpack.c.l.b16 %v34
  %v172 = vunpack.c.l.b16 %v35
  %v173 = vunpack.c.l.b16 %v36
  %v174 = vunpack.c.l.b16 %v37
  %v175 = vunpack.c.l.b16 %v38
  %v176 = vunpack.c.l.b16 %v39
  %v177 = vunpack.c.l.b16 %v40
  %v178 = vunpack.c.l.b16 %v41
  %v179 = vunpack.c.l.b16 %v42
  %v180 = vunpack.c.l.b16 %v43
  %v181 = vunpack.c.l.b16 %v44
  %v182 = vunpack.c.l.b16 %v45
  %v183 = vunpack.c.l.b16 %v46
  %v184 = vunpack.c.l.b16 %v47
  %v185 = vunpack.c.l.b16 %v48
  %v186 = vunpack.c.l.b16 %v49
  %v187 = vunpack.c.l.b16 %v50
  %v188 = vunpack.c.l.b16 %v51
  %v189 = vunpack.c.l.b16 %v52
  %v190 = vunpack.c.l.b16 %v53
  %v191 = vunpack.c.l.b16 %v54
  %v192 = vunpack.c.l.b16 %v55
  %v193 = vunpack.c.l.b16 %v56
  %v194 = vunpack.c.l.b16 %v57
  %v195 = vunpack.c.l.b16 %v58
  %v196 = vunpack.c.l.b16 %v59
  %v197 = vunpack.c.l.b16 %v60
  %v198 = vunpack.c.l.b16 %v61
  %v199 = vunpack.c.l.b16 %v62
  %v200 = vunpack.c.l.b16 %v63
  %v201 = vunpack.c.l.b16 %v64
  %v202 = vunpack.c.l.b16 %v65
  %v203 = vunpack.c.l.b16 %v66
  %v204 = vunpack.c.l.b16 %v67
  %v205 = vunpack.c.l.b16 %v68
  %v206 = vunpack.c.l.b16 %v69
  %v207 = vunpack.c.l.b16 %v70
  %v208 = vunpack.c.l.b16 %v71
  %v209 = vunpack.c.l.b16 %v72
  %v210 = vunpack.c.l.b16 %v73
  %v211 = vunpack.c.l.b16 %v74
  %v212 = vunpack.c.l.b16 %v75
  %v213 = vunpack.c.l.b16 %v76
  %v214 = vunpack.c.l.b16 %v77
  %v215 = vunpack.c.l.b16 %v78
  %v216 = vunpack.c.l.b16 %v79
  %v217 = vunpack.c.l.b16 %v80
  %v218 = vunpack.c.l.b16 %v81
  %v219 = vpack.c.b16 %v156, %v155
  %v220 = vpack.c.b16 %v158, %v157
  %v221 = vpack.c.b16 %v160, %v159
  %v222 = vpack.c.b16 %v162, %v161
  %v223 = vpack.c.b16 %v164, %v163
  %v224 = vpack.c.b16 %v166, %v165
  %v225 = vpack.c.b16 %v168, %v167
  %v226 = vpack.c.b16 %v170, %v169
  %v227 = vpack.c.b16 %v172, %v171
  %v228 = vpack.c.b16 %v174, %v173
  %v229 = vpack.c.b16 %v176, %v175
  %v230 = vpack.c.b16 %v178, %v177
  %v231 = vpack.c.b16 %v180, %v179
  %v232 = vpack.c.b16 %v182, %v181
  %v233 = vpack.c.b16 %v184, %v183
  %v234 = vpack.c.b16 %v186, %v185
  %v235 = vpack.c.b16 %v188, %v187
  %v236 = vpack.c.b16 %v190, %v189
  %v237 = vpack.c.b16 %v192, %v191
  %v238 = vpack.c.b16 %v194, %v193
  %v239 = vpack.c.b16 %v196, %v195
  %v240 = vpack.c.b16 %v198, %v197
  %v241 = vpack.c.b16 %v200, %v199
  %v242 = vpack.c.b16 %v202, %v201
  %v243 = vpack.c.b16 %v204, %v203
  %v244 = vpack.c.b16 %v206, %v205
  %v245 = vpack.c.b16 %v208, %v207
  %v246 = vpack.c.b16 %v210, %v209
  %v247 = vpack.c.b16 %v212, %v211
  %v248 = vpack.c.b16 %v214, %v213
  %v249 = vpack.c.b16 %v216, %v215
  %v250 = vpack.c.b16 %v218, %v217
  %v260 = vunpack.c.l.b16 %v82
  %v261 = vunpack.c.l.b16 %v83
  %v262 = vunpack.c.l.b16 %v84
  %v263 = vunpack.c.l.b16 %v85
  %v264 = vunpack.c.l.b16 %v86
  %v265 = vunpack.c.l.b16 %v87
  %v266 = vunpack.c.l.b16 %v88
  %v267 = vunpack.c.l.b16 %v89
  %v268 = vunpack.c.l.b16 %v90
  %v269 = vpack.c.b16 %v261, %v260
  %v270 = vpack.c.b16 %v263, %v262
  %v271 = vpack.c.b16 %v265, %v264
  %v272 = vpack.c.b16 %v267, %v266
  %v273 = vpack.c.b16 %v268, %v268
  %vm278 = vcmask 588800
  %v280 = vsel %vm278, %v219, 0
  %v283 = vsel %vm278, %v220, 0
  %v286 = vsel %vm278, %v221, 0
  %v289 = vsel %vm278, %v222, 0
  %v292 = vsel %vm278, %v223, 0
  %v295 = vsel %vm278, %v224, 0
  %v298 = vsel %vm278, %v225, 0
  %v301 = vsel %vm278, %v226, 0
  %v304 = vsel %vm278, %v227, 0
  %v307 = vsel %vm278, %v228, 0
  %v310 = vsel %vm278, %v229, 0
  %v313 = vsel %vm278, %v230, 0
  %v316 = vsel %vm278, %v231, 0
  %v319 = vsel %vm278, %v232, 0
  %v322 = vsel %vm278, %v233, 0
  %v325 = vsel %vm278, %v234, 0
  %v328 = vsel %vm278, %v235, 0
  %v331 = vsel %vm278, %v236, 0
  %v334 = vsel %vm278, %v237, 0
  %v337 = vsel %vm278, %v238, 0
  %v340 = vsel %vm278, %v239, 0
  %v343 = vsel %vm278, %v240, 0
  %v346 = vsel %vm278, %v241, 0
  %v349 = vsel %vm278, %v242, 0
  %v352 = vsel %vm278, %v243, 0
  %v355 = vsel %vm278, %v244, 0
  %v358 = vsel %vm278, %v245, 0
  %v361 = vsel %vm278, %v246, 0
  %v364 = vsel %vm278, %v247, 0
  %v367 = vsel %vm278, %v248, 0
  %v370 = vsel %vm278, %v249, 0
  %v373 = vsel %vm278, %v250, 0
  %vm375 = vcmask 1043456
  %v377 = vsel %vm375, %v273, 0
  %379 = vmatprep.subr.bf16.mxu0 0
  %380 = vmatpush1.bf16.msra.mxu0 0
  %381 = vmatprep.subr.bf16.mxu0 0
  %382 = vmatpush1.bf16.msra.mxu0 0
  %383 = vmatprep.subr.bf16.mxu0 0
  %384 = vmatpush1.bf16.msra.mxu0 0
  %385 = vmatprep.subr.bf16.mxu0 0
  %386 = vmatpush1.bf16.msra.mxu0 %v377
  %387 = vmatprep.subr.bf16.mxu0 0
  %388 = vmatpush1.bf16.msra.mxu0 %v272
  %389 = vmatprep.subr.bf16.mxu0 0
  %390 = vmatpush1.bf16.msra.mxu0 %v271
  %391 = vmatprep.subr.bf16.mxu0 0
  %392 = vmatpush1.bf16.msra.mxu0 %v270
  %393 = vmatprep.subr.bf16.mxu0 0
  %394 = vmatpush1.bf16.msra.mxu0 %v269
  %395 = vmatprep.subr.bf16.mxu0 0
  %396 = vmatpush2.bf16.msra.mxu0 0
  %397 = vmatprep.subr.bf16.mxu0 0
  %398 = vmatpush2.bf16.msra.mxu0 0
  %399 = vmatprep.subr.bf16.mxu0 0
  %400 = vmatpush2.bf16.msra.mxu0 0
  %401 = vmatprep.subr.bf16.mxu0 0
  %402 = vmatpush2.bf16.msra.mxu0 0
  %403 = vmatprep.subr.bf16.mxu0 0
  %404 = vmatpush2.bf16.msra.mxu0 0
  %405 = vmatprep.subr.bf16.mxu0 0
  %406 = vmatpush2.bf16.msra.mxu0 0
  %407 = vmatprep.subr.bf16.mxu0 0
  %408 = vmatpush2.bf16.msra.mxu0 0
  %409 = vmatprep.subr.bf16.mxu0 0
  %410 = vmatpush2.bf16.msra.mxu0 0
  %411 = vmatprep.mubr.bf16.mxu0 0
  %412 = vmatmul.mubr.bf16.gmra.mxu0 %v280
  %v413 = vpop.f32.mrf.mxu0
  %v414 = vadd.f32 0.0, %v413
  %v415 = vpop.f32.mrf.mxu0
  %v416 = vpop.f32.mrf.mxu0
  %v417 = vadd.f32 0.0, %v416
  %v418 = vpop.f32.mrf.mxu0
  %419 = vmatprep.mubr.bf16.mxu0 0
  %420 = vmatmul.mubr.bf16.gmra.mxu0 %v283
  %v421 = vpop.f32.mrf.mxu0
  %v422 = vadd.f32 0.0, %v421
  %v423 = vpop.f32.mrf.mxu0
  %v424 = vpop.f32.mrf.mxu0
  %v425 = vadd.f32 0.0, %v424
  %v426 = vpop.f32.mrf.mxu0
  %427 = vmatprep.mubr.bf16.mxu0 0
  %428 = vmatmul.mubr.bf16.gmra.mxu0 %v286
  %v429 = vpop.f32.mrf.mxu0
  %v430 = vadd.f32 0.0, %v429
  %v431 = vpop.f32.mrf.mxu0
  %v432 = vpop.f32.mrf.mxu0
  %v433 = vadd.f32 0.0, %v432
  %v434 = vpop.f32.mrf.mxu0
  %435 = vmatprep.mubr.bf16.mxu0 0
  %436 = vmatmul.mubr.bf16.gmra.mxu0 %v289
  %v437 = vpop.f32.mrf.mxu0
  %v438 = vadd.f32 0.0, %v437
  %v439 = vpop.f32.mrf.mxu0
  %v440 = vpop.f32.mrf.mxu0
  %v441 = vadd.f32 0.0, %v440
  %v442 = vpop.f32.mrf.mxu0
  %443 = vmatprep.mubr.bf16.mxu0 0
  %444 = vmatmul.mubr.bf16.gmra.mxu0 %v292
  %v445 = vpop.f32.mrf.mxu0
  %v446 = vadd.f32 0.0, %v445
  %v447 = vpop.f32.mrf.mxu0
  %v448 = vpop.f32.mrf.mxu0
  %v449 = vadd.f32 0.0, %v448
  %v450 = vpop.f32.mrf.mxu0
  %451 = vmatprep.mubr.bf16.mxu0 0
  %452 = vmatmul.mubr.bf16.gmra.mxu0 %v295
  %v453 = vpop.f32.mrf.mxu0
  %v454 = vadd.f32 0.0, %v453
  %v455 = vpop.f32.mrf.mxu0
  %v456 = vpop.f32.mrf.mxu0
  %v457 = vadd.f32 0.0, %v456
  %v458 = vpop.f32.mrf.mxu0
  %459 = vmatprep.mubr.bf16.mxu0 0
  %460 = vmatmul.mubr.bf16.gmra.mxu0 %v298
  %v461 = vpop.f32.mrf.mxu0
  %v462 = vadd.f32 0.0, %v461
  %v463 = vpop.f32.mrf.mxu0
  %v464 = vpop.f32.mrf.mxu0
  %v465 = vadd.f32 0.0, %v464
  %v466 = vpop.f32.mrf.mxu0
  %467 = vmatprep.mubr.bf16.mxu0 0
  %468 = vmatmul.mubr.bf16.gmra.mxu0 %v301
  %v469 = vpop.f32.mrf.mxu0
  %v470 = vadd.f32 0.0, %v469
  %v471 = vpop.f32.mrf.mxu0
  %v472 = vpop.f32.mrf.mxu0
  %v473 = vadd.f32 0.0, %v472
  %v474 = vpop.f32.mrf.mxu0
  %475 = vmatprep.mubr.bf16.mxu0 0
  %476 = vmatmul.mubr.bf16.gmra.mxu0 %v304
  %v477 = vpop.f32.mrf.mxu0
  %v478 = vadd.f32 0.0, %v477
  %v479 = vpop.f32.mrf.mxu0
  %v480 = vpop.f32.mrf.mxu0
  %v481 = vadd.f32 0.0, %v480
  %v482 = vpop.f32.mrf.mxu0
  %483 = vmatprep.mubr.bf16.mxu0 0
  %484 = vmatmul.mubr.bf16.gmra.mxu0 %v307
  %v485 = vpop.f32.mrf.mxu0
  %v486 = vadd.f32 0.0, %v485
  %v487 = vpop.f32.mrf.mxu0
  %v488 = vpop.f32.mrf.mxu0
  %v489 = vadd.f32 0.0, %v488
  %v490 = vpop.f32.mrf.mxu0
  %491 = vmatprep.mubr.bf16.mxu0 0
  %492 = vmatmul.mubr.bf16.gmra.mxu0 %v310
  %v493 = vpop.f32.mrf.mxu0
  %v494 = vadd.f32 0.0, %v493
  %v495 = vpop.f32.mrf.mxu0
  %v496 = vpop.f32.mrf.mxu0
  %v497 = vadd.f32 0.0, %v496
  %v498 = vpop.f32.mrf.mxu0
  %499 = vmatprep.mubr.bf16.mxu0 0
  %500 = vmatmul.mubr.bf16.gmra.mxu0 %v313
  %v501 = vpop.f32.mrf.mxu0
  %v502 = vadd.f32 0.0, %v501
  %v503 = vpop.f32.mrf.mxu0
  %v504 = vpop.f32.mrf.mxu0
  %v505 = vadd.f32 0.0, %v504
  %v506 = vpop.f32.mrf.mxu0
  %507 = vmatprep.mubr.bf16.mxu0 0
  %508 = vmatmul.mubr.bf16.gmra.mxu0 %v316
  %v509 = vpop.f32.mrf.mxu0
  %v510 = vadd.f32 0.0, %v509
  %v511 = vpop.f32.mrf.mxu0
  %v512 = vpop.f32.mrf.mxu0
  %v513 = vadd.f32 0.0, %v512
  %v514 = vpop.f32.mrf.mxu0
  %515 = vmatprep.mubr.bf16.mxu0 0
  %516 = vmatmul.mubr.bf16.gmra.mxu0 %v319
  %v517 = vpop.f32.mrf.mxu0
  %v518 = vadd.f32 0.0, %v517
  %v519 = vpop.f32.mrf.mxu0
  %v520 = vpop.f32.mrf.mxu0
  %v521 = vadd.f32 0.0, %v520
  %v522 = vpop.f32.mrf.mxu0
  %523 = vmatprep.mubr.bf16.mxu0 0
  %524 = vmatmul.mubr.bf16.gmra.mxu0 %v322
  %v525 = vpop.f32.mrf.mxu0
  %v526 = vadd.f32 0.0, %v525
  %v527 = vpop.f32.mrf.mxu0
  %v528 = vpop.f32.mrf.mxu0
  %v529 = vadd.f32 0.0, %v528
  %v530 = vpop.f32.mrf.mxu0
  %531 = vmatprep.mubr.bf16.mxu0 0
  %532 = vmatmul.mubr.bf16.gmra.mxu0 %v325
  %v533 = vpop.f32.mrf.mxu0
  %v534 = vadd.f32 0.0, %v533
  %v535 = vpop.f32.mrf.mxu0
  %v536 = vpop.f32.mrf.mxu0
  %v537 = vadd.f32 0.0, %v536
  %v538 = vpop.f32.mrf.mxu0
  %539 = vmatprep.mubr.bf16.mxu0 0
  %540 = vmatmul.mubr.bf16.gmra.mxu0 %v328
  %v541 = vpop.f32.mrf.mxu0
  %v542 = vadd.f32 0.0, %v541
  %v543 = vpop.f32.mrf.mxu0
  %v544 = vpop.f32.mrf.mxu0
  %v545 = vadd.f32 0.0, %v544
  %v546 = vpop.f32.mrf.mxu0
  %547 = vmatprep.mubr.bf16.mxu0 0
  %548 = vmatmul.mubr.bf16.gmra.mxu0 %v331
  %v549 = vpop.f32.mrf.mxu0
  %v550 = vadd.f32 0.0, %v549
  %v551 = vpop.f32.mrf.mxu0
  %v552 = vpop.f32.mrf.mxu0
  %v553 = vadd.f32 0.0, %v552
  %v554 = vpop.f32.mrf.mxu0
  %555 = vmatprep.mubr.bf16.mxu0 0
  %556 = vmatmul.mubr.bf16.gmra.mxu0 %v334
  %v557 = vpop.f32.mrf.mxu0
  %v558 = vadd.f32 0.0, %v557
  %v559 = vpop.f32.mrf.mxu0
  %v560 = vpop.f32.mrf.mxu0
  %v561 = vadd.f32 0.0, %v560
  %v562 = vpop.f32.mrf.mxu0
  %563 = vmatprep.mubr.bf16.mxu0 0
  %564 = vmatmul.mubr.bf16.gmra.mxu0 %v337
  %v565 = vpop.f32.mrf.mxu0
  %v566 = vadd.f32 0.0, %v565
  %v567 = vpop.f32.mrf.mxu0
  %v568 = vpop.f32.mrf.mxu0
  %v569 = vadd.f32 0.0, %v568
  %v570 = vpop.f32.mrf.mxu0
  %571 = vmatprep.mubr.bf16.mxu0 0
  %572 = vmatmul.mubr.bf16.gmra.mxu0 %v340
  %v573 = vpop.f32.mrf.mxu0
  %v574 = vadd.f32 0.0, %v573
  %v575 = vpop.f32.mrf.mxu0
  %v576 = vpop.f32.mrf.mxu0
  %v577 = vadd.f32 0.0, %v576
  %v578 = vpop.f32.mrf.mxu0
  %579 = vmatprep.mubr.bf16.mxu0 0
  %580 = vmatmul.mubr.bf16.gmra.mxu0 %v343
  %v581 = vpop.f32.mrf.mxu0
  %v582 = vadd.f32 0.0, %v581
  %v583 = vpop.f32.mrf.mxu0
  %v584 = vpop.f32.mrf.mxu0
  %v585 = vadd.f32 0.0, %v584
  %v586 = vpop.f32.mrf.mxu0
  %587 = vmatprep.mubr.bf16.mxu0 0
  %588 = vmatmul.mubr.bf16.gmra.mxu0 %v346
  %v589 = vpop.f32.mrf.mxu0
  %v590 = vadd.f32 0.0, %v589
  %v591 = vpop.f32.mrf.mxu0
  %v592 = vpop.f32.mrf.mxu0
  %v593 = vadd.f32 0.0, %v592
  %v594 = vpop.f32.mrf.mxu0
  %595 = vmatprep.mubr.bf16.mxu0 0
  %596 = vmatmul.mubr.bf16.gmra.mxu0 %v349
  %v597 = vpop.f32.mrf.mxu0
  %v598 = vadd.f32 0.0, %v597
  %v599 = vpop.f32.mrf.mxu0
  %v600 = vpop.f32.mrf.mxu0
  %v601 = vadd.f32 0.0, %v600
  %v602 = vpop.f32.mrf.mxu0
  %603 = vmatprep.mubr.bf16.mxu0 0
  %604 = vmatmul.mubr.bf16.gmra.mxu0 %v352
  %v605 = vpop.f32.mrf.mxu0
  %v606 = vadd.f32 0.0, %v605
  %v607 = vpop.f32.mrf.mxu0
  %v608 = vpop.f32.mrf.mxu0
  %v609 = vadd.f32 0.0, %v608
  %v610 = vpop.f32.mrf.mxu0
  %611 = vmatprep.mubr.bf16.mxu0 0
  %612 = vmatmul.mubr.bf16.gmra.mxu0 %v355
  %v613 = vpop.f32.mrf.mxu0
  %v614 = vadd.f32 0.0, %v613
  %v615 = vpop.f32.mrf.mxu0
  %v616 = vpop.f32.mrf.mxu0
  %v617 = vadd.f32 0.0, %v616
  %v618 = vpop.f32.mrf.mxu0
  %619 = vmatprep.mubr.bf16.mxu0 0
  %620 = vmatmul.mubr.bf16.gmra.mxu0 %v358
  %v621 = vpop.f32.mrf.mxu0
  %v622 = vadd.f32 0.0, %v621
  %v623 = vpop.f32.mrf.mxu0
  %v624 = vpop.f32.mrf.mxu0
  %v625 = vadd.f32 0.0, %v624
  %v626 = vpop.f32.mrf.mxu0
  %627 = vmatprep.mubr.bf16.mxu0 0
  %628 = vmatmul.mubr.bf16.gmra.mxu0 %v361
  %v629 = vpop.f32.mrf.mxu0
  %v630 = vadd.f32 0.0, %v629
  %v631 = vpop.f32.mrf.mxu0
  %v632 = vpop.f32.mrf.mxu0
  %v633 = vadd.f32 0.0, %v632
  %v634 = vpop.f32.mrf.mxu0
  %635 = vmatprep.mubr.bf16.mxu0 0
  %636 = vmatmul.mubr.bf16.gmra.mxu0 %v364
  %v637 = vpop.f32.mrf.mxu0
  %v638 = vadd.f32 0.0, %v637
  %v639 = vpop.f32.mrf.mxu0
  %v640 = vpop.f32.mrf.mxu0
  %v641 = vadd.f32 0.0, %v640
  %v642 = vpop.f32.mrf.mxu0
  %643 = vmatprep.mubr.bf16.mxu0 0
  %644 = vmatmul.mubr.bf16.gmra.mxu0 %v367
  %v645 = vpop.f32.mrf.mxu0
  %v646 = vadd.f32 0.0, %v645
  %v647 = vpop.f32.mrf.mxu0
  %v648 = vpop.f32.mrf.mxu0
  %v649 = vadd.f32 0.0, %v648
  %v650 = vpop.f32.mrf.mxu0
  %651 = vmatprep.mubr.bf16.mxu0 0
  %652 = vmatmul.mubr.bf16.gmra.mxu0 %v370
  %v653 = vpop.f32.mrf.mxu0
  %v654 = vadd.f32 0.0, %v653
  %v655 = vpop.f32.mrf.mxu0
  %v656 = vpop.f32.mrf.mxu0
  %v657 = vadd.f32 0.0, %v656
  %v658 = vpop.f32.mrf.mxu0
  %659 = vmatprep.mubr.bf16.mxu0 0
  %660 = vmatmul.mubr.bf16.gmra.mxu0 %v373
  %v661 = vpop.f32.mrf.mxu0
  %v662 = vadd.f32 0.0, %v661
  %v663 = vpop.f32.mrf.mxu0
  %v664 = vpop.f32.mrf.mxu0
  %v665 = vadd.f32 0.0, %v664
  %v666 = vpop.f32.mrf.mxu0
  %667 = vdwg.mxu0
  %v668 = vld [vmem:[%s2] sm:$0x1]
  %v670 = vlaneseq
  %v671 = vshrl.u32 %v670, 7
  %v672 = vsub.s32 0, %v671
  %v673 = vrot.slane %v668, %v672
  %v675 = vmul.f32 %v414, %v673
  %v676 = vmul.f32 %v417, %v673
  %v677 = vmul.f32 %v422, %v673
  %v678 = vmul.f32 %v425, %v673
  %v679 = vmul.f32 %v430, %v673
  %v680 = vmul.f32 %v433, %v673
  %v681 = vmul.f32 %v438, %v673
  %v682 = vmul.f32 %v441, %v673
  %v683 = vmul.f32 %v446, %v673
  %v684 = vmul.f32 %v449, %v673
  %v685 = vmul.f32 %v454, %v673
  %v686 = vmul.f32 %v457, %v673
  %v687 = vmul.f32 %v462, %v673
  %v688 = vmul.f32 %v465, %v673
  %v689 = vmul.f32 %v470, %v673
  %v690 = vmul.f32 %v473, %v673
  %v691 = vmul.f32 %v478, %v673
  %v692 = vmul.f32 %v481, %v673
  %v693 = vmul.f32 %v486, %v673
  %v694 = vmul.f32 %v489, %v673
  %v695 = vmul.f32 %v494, %v673
  %v696 = vmul.f32 %v497, %v673
  %v697 = vmul.f32 %v502, %v673
  %v698 = vmul.f32 %v505, %v673
  %v699 = vmul.f32 %v510, %v673
  %v700 = vmul.f32 %v513, %v673
  %v701 = vmul.f32 %v518, %v673
  %v702 = vmul.f32 %v521, %v673
  %v703 = vmul.f32 %v526, %v673
  %v704 = vmul.f32 %v529, %v673
  %v705 = vmul.f32 %v534, %v673
  %v706 = vmul.f32 %v537, %v673
  %v707 = vmul.f32 %v542, %v673
  %v708 = vmul.f32 %v545, %v673
  %v709 = vmul.f32 %v550, %v673
  %v710 = vmul.f32 %v553, %v673
  %v711 = vmul.f32 %v558, %v673
  %v712 = vmul.f32 %v561, %v673
  %v713 = vmul.f32 %v566, %v673
  %v714 = vmul.f32 %v569, %v673
  %v715 = vmul.f32 %v574, %v673
  %v716 = vmul.f32 %v577, %v673
  %v717 = vmul.f32 %v582, %v673
  %v718 = vmul.f32 %v585, %v673
  %v719 = vmul.f32 %v590, %v673
  %v720 = vmul.f32 %v593, %v673
  %v721 = vmul.f32 %v598, %v673
  %v722 = vmul.f32 %v601, %v673
  %v723 = vmul.f32 %v606, %v673
  %v724 = vmul.f32 %v609, %v673
  %v725 = vmul.f32 %v614, %v673
  %v726 = vmul.f32 %v617, %v673
  %v727 = vmul.f32 %v622, %v673
  %v728 = vmul.f32 %v625, %v673
  %v729 = vmul.f32 %v630, %v673
  %v730 = vmul.f32 %v633, %v673
  %v731 = vmul.f32 %v638, %v673
  %v732 = vmul.f32 %v641, %v673
  %v733 = vmul.f32 %v646, %v673
  %v734 = vmul.f32 %v649, %v673
  %v735 = vmul.f32 %v654, %v673
  %v736 = vmul.f32 %v657, %v673
  %v737 = vmul.f32 %v662, %v673
  %v738 = vmul.f32 %v665, %v673
  %v739 = vld [vmem:[%s3] sm:$0x1]
  %v741 = vlaneseq
  %v742 = vshrl.u32 %v741, 7
  %v743 = vsub.s32 0, %v742
  %v744 = vrot.slane %v739, %v743
  %v746 = vadd.f32 %v675, %v744
  %v747 = vadd.f32 %v676, %v744
  %v748 = vadd.f32 %v677, %v744
  %v749 = vadd.f32 %v678, %v744
  %v750 = vadd.f32 %v679, %v744
  %v751 = vadd.f32 %v680, %v744
  %v752 = vadd.f32 %v681, %v744
  %v753 = vadd.f32 %v682, %v744
  %v754 = vadd.f32 %v683, %v744
  %v755 = vadd.f32 %v684, %v744
  %v756 = vadd.f32 %v685, %v744
  %v757 = vadd.f32 %v686, %v744
  %v758 = vadd.f32 %v687, %v744
  %v759 = vadd.f32 %v688, %v744
  %v760 = vadd.f32 %v689, %v744
  %v761 = vadd.f32 %v690, %v744
  %v762 = vadd.f32 %v691, %v744
  %v763 = vadd.f32 %v692, %v744
  %v764 = vadd.f32 %v693, %v744
  %v765 = vadd.f32 %v694, %v744
  %v766 = vadd.f32 %v695, %v744
  %v767 = vadd.f32 %v696, %v744
  %v768 = vadd.f32 %v697, %v744
  %v769 = vadd.f32 %v698, %v744
  %v770 = vadd.f32 %v699, %v744
  %v771 = vadd.f32 %v700, %v744
  %v772 = vadd.f32 %v701, %v744
  %v773 = vadd.f32 %v702, %v744
  %v774 = vadd.f32 %v703, %v744
  %v775 = vadd.f32 %v704, %v744
  %v776 = vadd.f32 %v705, %v744
  %v777 = vadd.f32 %v706, %v744
  %v778 = vadd.f32 %v707, %v744
  %v779 = vadd.f32 %v708, %v744
  %v780 = vadd.f32 %v709, %v744
  %v781 = vadd.f32 %v710, %v744
  %v782 = vadd.f32 %v711, %v744
  %v783 = vadd.f32 %v712, %v744
  %v784 = vadd.f32 %v713, %v744
  %v785 = vadd.f32 %v714, %v744
  %v786 = vadd.f32 %v715, %v744
  %v787 = vadd.f32 %v716, %v744
  %v788 = vadd.f32 %v717, %v744
  %v789 = vadd.f32 %v718, %v744
  %v790 = vadd.f32 %v719, %v744
  %v791 = vadd.f32 %v720, %v744
  %v792 = vadd.f32 %v721, %v744
  %v793 = vadd.f32 %v722, %v744
  %v794 = vadd.f32 %v723, %v744
  %v795 = vadd.f32 %v724, %v744
  %v796 = vadd.f32 %v725, %v744
  %v797 = vadd.f32 %v726, %v744
  %v798 = vadd.f32 %v727, %v744
  %v799 = vadd.f32 %v728, %v744
  %v800 = vadd.f32 %v729, %v744
  %v801 = vadd.f32 %v730, %v744
  %v802 = vadd.f32 %v731, %v744
  %v803 = vadd.f32 %v732, %v744
  %v804 = vadd.f32 %v733, %v744
  %v805 = vadd.f32 %v734, %v744
  %v806 = vadd.f32 %v735, %v744
  %v807 = vadd.f32 %v736, %v744
  %v808 = vadd.f32 %v737, %v744
  %v809 = vadd.f32 %v738, %v744
  %v810 = vmax.f32 %v746, 0.0
  %v811 = vmax.f32 %v747, 0.0
  %v812 = vmax.f32 %v748, 0.0
  %v813 = vmax.f32 %v749, 0.0
  %v814 = vmax.f32 %v750, 0.0
  %v815 = vmax.f32 %v751, 0.0
  %v816 = vmax.f32 %v752, 0.0
  %v817 = vmax.f32 %v753, 0.0
  %v818 = vmax.f32 %v754, 0.0
  %v819 = vmax.f32 %v755, 0.0
  %v820 = vmax.f32 %v756, 0.0
  %v821 = vmax.f32 %v757, 0.0
  %v822 = vmax.f32 %v758, 0.0
  %v823 = vmax.f32 %v759, 0.0
  %v824 = vmax.f32 %v760, 0.0
  %v825 = vmax.f32 %v761, 0.0
  %v826 = vmax.f32 %v762, 0.0
  %v827 = vmax.f32 %v763, 0.0
  %v828 = vmax.f32 %v764, 0.0
  %v829 = vmax.f32 %v765, 0.0
  %v830 = vmax.f32 %v766, 0.0
  %v831 = vmax.f32 %v767, 0.0
  %v832 = vmax.f32 %v768, 0.0
  %v833 = vmax.f32 %v769, 0.0
  %v834 = vmax.f32 %v770, 0.0
  %v835 = vmax.f32 %v771, 0.0
  %v836 = vmax.f32 %v772, 0.0
  %v837 = vmax.f32 %v773, 0.0
  %v838 = vmax.f32 %v774, 0.0
  %v839 = vmax.f32 %v775, 0.0
  %v840 = vmax.f32 %v776, 0.0
  %v841 = vmax.f32 %v777, 0.0
  %v842 = vmax.f32 %v778, 0.0
  %v843 = vmax.f32 %v779, 0.0
  %v844 = vmax.f32 %v780, 0.0
  %v845 = vmax.f32 %v781, 0.0
  %v846 = vmax.f32 %v782, 0.0
  %v847 = vmax.f32 %v783, 0.0
  %v848 = vmax.f32 %v784, 0.0
  %v849 = vmax.f32 %v785, 0.0
  %v850 = vmax.f32 %v786, 0.0
  %v851 = vmax.f32 %v787, 0.0
  %v852 = vmax.f32 %v788, 0.0
  %v853 = vmax.f32 %v789, 0.0
  %v854 = vmax.f32 %v790, 0.0
  %v855 = vmax.f32 %v791, 0.0
  %v856 = vmax.f32 %v792, 0.0
  %v857 = vmax.f32 %v793, 0.0
  %v858 = vmax.f32 %v794, 0.0
  %v859 = vmax.f32 %v795, 0.0
  %v860 = vmax.f32 %v796, 0.0
  %v861 = vmax.f32 %v797, 0.0
  %v862 = vmax.f32 %v798, 0.0
  %v863 = vmax.f32 %v799, 0.0
  %v864 = vmax.f32 %v800, 0.0
  %v865 = vmax.f32 %v801, 0.0
  %v866 = vmax.f32 %v802, 0.0
  %v867 = vmax.f32 %v803, 0.0
  %v868 = vmax.f32 %v804, 0.0
  %v869 = vmax.f32 %v805, 0.0
  %v870 = vmax.f32 %v806, 0.0
  %v871 = vmax.f32 %v807, 0.0
  %v872 = vmax.f32 %v808, 0.0
  %v873 = vmax.f32 %v809, 0.0
  %v874 = vpack.c.bf16 %v811, %v810
  %v875 = vpack.c.bf16 %v813, %v812
  %v876 = vpack.c.bf16 %v815, %v814
  %v877 = vpack.c.bf16 %v817, %v816
  %v878 = vpack.c.bf16 %v819, %v818
  %v879 = vpack.c.bf16 %v821, %v820
  %v880 = vpack.c.bf16 %v823, %v822
  %v881 = vpack.c.bf16 %v825, %v824
  %v882 = vpack.c.bf16 %v827, %v826
  %v883 = vpack.c.bf16 %v829, %v828
  %v884 = vpack.c.bf16 %v831, %v830
  %v885 = vpack.c.bf16 %v833, %v832
  %v886 = vpack.c.bf16 %v835, %v834
  %v887 = vpack.c.bf16 %v837, %v836
  %v888 = vpack.c.bf16 %v839, %v838
  %v889 = vpack.c.bf16 %v841, %v840
  %v890 = vpack.c.bf16 %v843, %v842
  %v891 = vpack.c.bf16 %v845, %v844
  %v892 = vpack.c.bf16 %v847, %v846
  %v893 = vpack.c.bf16 %v849, %v848
  %v894 = vpack.c.bf16 %v851, %v850
  %v895 = vpack.c.bf16 %v853, %v852
  %v896 = vpack.c.bf16 %v855, %v854
  %v897 = vpack.c.bf16 %v857, %v856
  %v898 = vpack.c.bf16 %v859, %v858
  %v899 = vpack.c.bf16 %v861, %v860
  %v900 = vpack.c.bf16 %v863, %v862
  %v901 = vpack.c.bf16 %v865, %v864
  %v902 = vpack.c.bf16 %v867, %v866
  %v903 = vpack.c.bf16 %v869, %v868
  %v904 = vpack.c.bf16 %v871, %v870
  %v905 = vpack.c.bf16 %v873, %v872
  %v938 = vunpack.c.l.b16 %v874
  %v939 = vunpack.c.h.b16 %v874
  %v940 = vunpack.c.l.b16 %v875
  %v941 = vunpack.c.h.b16 %v875
  %v942 = vunpack.c.l.b16 %v876
  %v943 = vunpack.c.h.b16 %v876
  %v944 = vunpack.c.l.b16 %v877
  %v945 = vunpack.c.h.b16 %v877
  %v946 = vunpack.c.l.b16 %v878
  %v947 = vunpack.c.h.b16 %v878
  %v948 = vunpack.c.l.b16 %v879
  %v949 = vunpack.c.h.b16 %v879
  %v950 = vunpack.c.l.b16 %v880
  %v951 = vunpack.c.h.b16 %v880
  %v952 = vunpack.c.l.b16 %v881
  %v953 = vunpack.c.h.b16 %v881
  %v954 = vunpack.c.l.b16 %v882
  %v955 = vunpack.c.h.b16 %v882
  %v956 = vunpack.c.l.b16 %v883
  %v957 = vunpack.c.h.b16 %v883
  %v958 = vunpack.c.l.b16 %v884
  %v959 = vunpack.c.h.b16 %v884
  %v960 = vunpack.c.l.b16 %v885
  %v961 = vunpack.c.h.b16 %v885
  %v962 = vunpack.c.l.b16 %v886
  %v963 = vunpack.c.h.b16 %v886
  %v964 = vunpack.c.l.b16 %v887
  %v965 = vunpack.c.h.b16 %v887
  %v966 = vunpack.c.l.b16 %v888
  %v967 = vunpack.c.h.b16 %v888
  %v968 = vunpack.c.l.b16 %v889
  %v969 = vunpack.c.h.b16 %v889
  %v970 = vunpack.c.l.b16 %v890
  %v971 = vunpack.c.h.b16 %v890
  %v972 = vunpack.c.l.b16 %v891
  %v973 = vunpack.c.h.b16 %v891
  %v974 = vunpack.c.l.b16 %v892
  %v975 = vunpack.c.h.b16 %v892
  %v976 = vunpack.c.l.b16 %v893
  %v977 = vunpack.c.h.b16 %v893
  %v978 = vunpack.c.l.b16 %v894
  %v979 = vunpack.c.h.b16 %v894
  %v980 = vunpack.c.l.b16 %v895
  %v981 = vunpack.c.h.b16 %v895
  %v982 = vunpack.c.l.b16 %v896
  %v983 = vunpack.c.h.b16 %v896
  %v984 = vunpack.c.l.b16 %v897
  %v985 = vunpack.c.h.b16 %v897
  %v986 = vunpack.c.l.b16 %v898
  %v987 = vunpack.c.h.b16 %v898
  %v988 = vunpack.c.l.b16 %v899
  %v989 = vunpack.c.h.b16 %v899
  %v990 = vunpack.c.l.b16 %v900
  %v991 = vunpack.c.h.b16 %v900
  %v992 = vunpack.c.l.b16 %v901
  %v993 = vunpack.c.h.b16 %v901
  %v994 = vunpack.c.l.b16 %v902
  %v995 = vunpack.c.h.b16 %v902
  %v996 = vunpack.c.l.b16 %v903
  %v997 = vunpack.c.h.b16 %v903
  %v998 = vunpack.c.l.b16 %v904
  %v999 = vunpack.c.h.b16 %v904
  %v1000 = vunpack.c.l.b16 %v905
  %v1001 = vunpack.c.h.b16 %v905
  %v1002 = vpack.c.b16 %v938, %v938
  %v1003 = vpack.c.b16 %v939, %v939
  %v1004 = vpack.c.b16 %v940, %v940
  %v1005 = vpack.c.b16 %v941, %v941
  %v1006 = vpack.c.b16 %v942, %v942
  %v1007 = vpack.c.b16 %v943, %v943
  %v1008 = vpack.c.b16 %v944, %v944
  %v1009 = vpack.c.b16 %v945, %v945
  %v1010 = vpack.c.b16 %v946, %v946
  %v1011 = vpack.c.b16 %v947, %v947
  %v1012 = vpack.c.b16 %v948, %v948
  %v1013 = vpack.c.b16 %v949, %v949
  %v1014 = vpack.c.b16 %v950, %v950
  %v1015 = vpack.c.b16 %v951, %v951
  %v1016 = vpack.c.b16 %v952, %v952
  %v1017 = vpack.c.b16 %v953, %v953
  %v1018 = vpack.c.b16 %v954, %v954
  %v1019 = vpack.c.b16 %v955, %v955
  %v1020 = vpack.c.b16 %v956, %v956
  %v1021 = vpack.c.b16 %v957, %v957
  %v1022 = vpack.c.b16 %v958, %v958
  %v1023 = vpack.c.b16 %v959, %v959
  %v1024 = vpack.c.b16 %v960, %v960
  %v1025 = vpack.c.b16 %v961, %v961
  %v1026 = vpack.c.b16 %v962, %v962
  %v1027 = vpack.c.b16 %v963, %v963
  %v1028 = vpack.c.b16 %v964, %v964
  %v1029 = vpack.c.b16 %v965, %v965
  %v1030 = vpack.c.b16 %v966, %v966
  %v1031 = vpack.c.b16 %v967, %v967
  %v1032 = vpack.c.b16 %v968, %v968
  %v1033 = vpack.c.b16 %v969, %v969
  %v1034 = vpack.c.b16 %v970, %v970
  %v1035 = vpack.c.b16 %v971, %v971
  %v1036 = vpack.c.b16 %v972, %v972
  %v1037 = vpack.c.b16 %v973, %v973
  %v1038 = vpack.c.b16 %v974, %v974
  %v1039 = vpack.c.b16 %v975, %v975
  %v1040 = vpack.c.b16 %v976, %v976
  %v1041 = vpack.c.b16 %v977, %v977
  %v1042 = vpack.c.b16 %v978, %v978
  %v1043 = vpack.c.b16 %v979, %v979
  %v1044 = vpack.c.b16 %v980, %v980
  %v1045 = vpack.c.b16 %v981, %v981
  %v1046 = vpack.c.b16 %v982, %v982
  %v1047 = vpack.c.b16 %v983, %v983
  %v1048 = vpack.c.b16 %v984, %v984
  %v1049 = vpack.c.b16 %v985, %v985
  %v1050 = vpack.c.b16 %v986, %v986
  %v1051 = vpack.c.b16 %v987, %v987
  %v1052 = vpack.c.b16 %v988, %v988
  %v1053 = vpack.c.b16 %v989, %v989
  %v1054 = vpack.c.b16 %v990, %v990
  %v1055 = vpack.c.b16 %v991, %v991
  %v1056 = vpack.c.b16 %v992, %v992
  %v1057 = vpack.c.b16 %v993, %v993
  %v1058 = vpack.c.b16 %v994, %v994
  %v1059 = vpack.c.b16 %v995, %v995
  %v1060 = vpack.c.b16 %v996, %v996
  %v1061 = vpack.c.b16 %v997, %v997
  %v1062 = vpack.c.b16 %v998, %v998
  %v1063 = vpack.c.b16 %v999, %v999
  %v1064 = vpack.c.b16 %v1000, %v1000
  %v1065 = vpack.c.b16 %v1001, %v1001
  %vm1130 = vcmask 125952
  %1131 = vst.msk [vmem:[%s4] sm:$0xf] %vm1130, %v1002
  %1132 = vst.msk [vmem:[%s4 + $0x4] sm:$0xf] %vm1130, %v1003
  %1133 = vst.msk [vmem:[%s4 + $0x8] sm:$0xf] %vm1130, %v1004
  %1134 = vst.msk [vmem:[%s4 + $0xc] sm:$0xf] %vm1130, %v1005
  %1135 = vst.msk [vmem:[%s4 + $0x10] sm:$0xf] %vm1130, %v1006
  %1136 = vst.msk [vmem:[%s4 + $0x14] sm:$0xf] %vm1130, %v1007
  %1137 = vst.msk [vmem:[%s4 + $0x18] sm:$0xf] %vm1130, %v1008
  %1138 = vst.msk [vmem:[%s4 + $0x1c] sm:$0xf] %vm1130, %v1009
  %1139 = vst.msk [vmem:[%s4 + $0x20] sm:$0xf] %vm1130, %v1010
  %1140 = vst.msk [vmem:[%s4 + $0x24] sm:$0xf] %vm1130, %v1011
  %1141 = vst.msk [vmem:[%s4 + $0x28] sm:$0xf] %vm1130, %v1012
  %1142 = vst.msk [vmem:[%s4 + $0x2c] sm:$0xf] %vm1130, %v1013
  %1143 = vst.msk [vmem:[%s4 + $0x30] sm:$0xf] %vm1130, %v1014
  %1144 = vst.msk [vmem:[%s4 + $0x34] sm:$0xf] %vm1130, %v1015
  %1145 = vst.msk [vmem:[%s4 + $0x38] sm:$0xf] %vm1130, %v1016
  %1146 = vst.msk [vmem:[%s4 + $0x3c] sm:$0xf] %vm1130, %v1017
  %1147 = vst.msk [vmem:[%s4 + $0x40] sm:$0xf] %vm1130, %v1018
  %1148 = vst.msk [vmem:[%s4 + $0x44] sm:$0xf] %vm1130, %v1019
  %1149 = vst.msk [vmem:[%s4 + $0x48] sm:$0xf] %vm1130, %v1020
  %1150 = vst.msk [vmem:[%s4 + $0x4c] sm:$0xf] %vm1130, %v1021
  %1151 = vst.msk [vmem:[%s4 + $0x50] sm:$0xf] %vm1130, %v1022
  %1152 = vst.msk [vmem:[%s4 + $0x54] sm:$0xf] %vm1130, %v1023
  %1153 = vst.msk [vmem:[%s4 + $0x58] sm:$0xf] %vm1130, %v1024
  %1154 = vst.msk [vmem:[%s4 + $0x5c] sm:$0xf] %vm1130, %v1025
  %1155 = vst.msk [vmem:[%s4 + $0x60] sm:$0xf] %vm1130, %v1026
  %1156 = vst.msk [vmem:[%s4 + $0x64] sm:$0xf] %vm1130, %v1027
  %1157 = vst.msk [vmem:[%s4 + $0x68] sm:$0xf] %vm1130, %v1028
  %1158 = vst.msk [vmem:[%s4 + $0x6c] sm:$0xf] %vm1130, %v1029
  %1159 = vst.msk [vmem:[%s4 + $0x70] sm:$0xf] %vm1130, %v1030
  %1160 = vst.msk [vmem:[%s4 + $0x74] sm:$0xf] %vm1130, %v1031
  %1161 = vst.msk [vmem:[%s4 + $0x78] sm:$0xf] %vm1130, %v1032
  %1162 = vst.msk [vmem:[%s4 + $0x7c] sm:$0xf] %vm1130, %v1033
  %1163 = vst.msk [vmem:[%s4 + $0x80] sm:$0xf] %vm1130, %v1034
  %1164 = vst.msk [vmem:[%s4 + $0x84] sm:$0xf] %vm1130, %v1035
  %1165 = vst.msk [vmem:[%s4 + $0x88] sm:$0xf] %vm1130, %v1036
  %1166 = vst.msk [vmem:[%s4 + $0x8c] sm:$0xf] %vm1130, %v1037
  %1167 = vst.msk [vmem:[%s4 + $0x90] sm:$0xf] %vm1130, %v1038
  %1168 = vst.msk [vmem:[%s4 + $0x94] sm:$0xf] %vm1130, %v1039
  %1169 = vst.msk [vmem:[%s4 + $0x98] sm:$0xf] %vm1130, %v1040
  %1170 = vst.msk [vmem:[%s4 + $0x9c] sm:$0xf] %vm1130, %v1041
  %1171 = vst.msk [vmem:[%s4 + $0xa0] sm:$0xf] %vm1130, %v1042
  %1172 = vst.msk [vmem:[%s4 + $0xa4] sm:$0xf] %vm1130, %v1043
  %1173 = vst.msk [vmem:[%s4 + $0xa8] sm:$0xf] %vm1130, %v1044
  %1174 = vst.msk [vmem:[%s4 + $0xac] sm:$0xf] %vm1130, %v1045
  %1175 = vst.msk [vmem:[%s4 + $0xb0] sm:$0xf] %vm1130, %v1046
  %1176 = vst.msk [vmem:[%s4 + $0xb4] sm:$0xf] %vm1130, %v1047
  %1177 = vst.msk [vmem:[%s4 + $0xb8] sm:$0xf] %vm1130, %v1048
  %1178 = vst.msk [vmem:[%s4 + $0xbc] sm:$0xf] %vm1130, %v1049
  %1179 = vst.msk [vmem:[%s4 + $0xc0] sm:$0xf] %vm1130, %v1050
  %1180 = vst.msk [vmem:[%s4 + $0xc4] sm:$0xf] %vm1130, %v1051
  %1181 = vst.msk [vmem:[%s4 + $0xc8] sm:$0xf] %vm1130, %v1052
  %1182 = vst.msk [vmem:[%s4 + $0xcc] sm:$0xf] %vm1130, %v1053
  %1183 = vst.msk [vmem:[%s4 + $0xd0] sm:$0xf] %vm1130, %v1054
  %1184 = vst.msk [vmem:[%s4 + $0xd4] sm:$0xf] %vm1130, %v1055
  %1185 = vst.msk [vmem:[%s4 + $0xd8] sm:$0xf] %vm1130, %v1056
  %1186 = vst.msk [vmem:[%s4 + $0xdc] sm:$0xf] %vm1130, %v1057
  %1187 = vst.msk [vmem:[%s4 + $0xe0] sm:$0xf] %vm1130, %v1058
  %1188 = vst.msk [vmem:[%s4 + $0xe4] sm:$0xf] %vm1130, %v1059
  %1189 = vst.msk [vmem:[%s4 + $0xe8] sm:$0xf] %vm1130, %v1060
  %1190 = vst.msk [vmem:[%s4 + $0xec] sm:$0xf] %vm1130, %v1061
  %1191 = vst.msk [vmem:[%s4 + $0xf0] sm:$0xf] %vm1130, %v1062
  %1192 = vst.msk [vmem:[%s4 + $0xf4] sm:$0xf] %vm1130, %v1063
  %1193 = vst.msk [vmem:[%s4 + $0xf8] sm:$0xf] %vm1130, %v1064
  %1194 = vst.msk [vmem:[%s4 + $0xfc] sm:$0xf] %vm1130, %v1065
  // Predicated region
  $region18: #{tpu_custom_call.1} parent=0 // pred_check
    _
  $region19: #{tpu_custom_call.1} parent=0 // pred_check_branch
    %1196 = sbr.rel (0) target = $region21
  $region20: #{tpu_custom_call.1} parent=0 // pred_region
    _
  $region21: #{tpu_custom_call.1} parent=0 // pred_fallthru
    _
  // Predicated region
  $region22: #{tpu_custom_call.1} parent=0 // pred_check
    _
  $region23: #{tpu_custom_call.1} parent=0 // pred_check_branch
    %1198 = sbr.rel (0) target = $region25
  $region24: #{tpu_custom_call.1} parent=0 // pred_region
    _
  $region25: #{tpu_custom_call.1} parent=0 // pred_fallthru
    _

</llo_original>
